<compile_context>
chip_gen: v5e
topology: v5e:2x2
jax: 0.10.0
libtpu: 0.0.40
codegen_flags: <defaults>
</compile_context>

<pallas_src>
import jax
import jax.numpy as jnp
import numpy as np
from jax.experimental import pallas as pl
from jax.experimental.pallas import tpu as pltpu


def _round_up(x, m):
    return (x + m - 1) // m * m


def _pick_row_tile(oh2, ow2, max_rows=2048):
    """Largest divisor of oh2 with tile_rows*ow2 <= max_rows (bounds VMEM; v7x-safe)."""
    limit = max(1, max_rows // max(ow2, 1))
    tr = 1
    for cand in range(1, oh2 + 1):
        if oh2 % cand == 0 and cand <= limit:
            tr = cand
    return tr


# ----------------------------------------------------------------------------
# Fused kernel: conv1(+bias,+LReLU) -> VMEM plane scratch -> conv2(+bias,+LReLU)
#   patch_ref: (RPT*OW2, 3*KS)  bf16   RPT = 2*TR+1 plane rows per tile
#   w1_ref   : (3*KS, 3*Ep)     bf16   block-diag conv1 weight (bias folded in)
#   w2_ref   : (3, 3*Ep, Ep)    bf16   conv2 per-kh weight, kw folded along K
#   b2_ref   : (1, Ep)          f32
#   out_ref  : (TR*OW2, Ep)     bf16
#   plane_ref: (RPT*OW2, 3*Ep)  bf16   fused h1 (never leaves VMEM)
#   acc_ref  : (TR*OW2, Ep)     f32    conv2 accumulator
# ----------------------------------------------------------------------------
def _make_kernel(TR, OW2, M1, CM):
    M2 = TR * OW2
    # plane-row offsets (flattened, contiguous) for conv2 row-taps kh = 0, 1, 2
    off_kh = (0, (TR + 1) * OW2, OW2)

    def kernel(patch_ref, w1_ref, w2_ref, b2_ref, out_ref, plane_ref, acc_ref):
        # --- conv1 (bias carried by the constant-1 feature) + LeakyReLU(0.1) ---
        for m0 in range(0, M1, CM):
            mc = min(CM, M1 - m0)
            p = patch_ref[pl.ds(m0, mc), :]
            h = jnp.dot(p, w1_ref[...], preferred_element_type=jnp.float32)
            h = jnp.maximum(h, 0.1 * h)
            plane_ref[pl.ds(m0, mc), :] = h.astype(plane_ref.dtype)

        # --- conv2: 3 row taps, columns folded into K = 3*Ep, f32 scratch acc ---
        acc_ref[...] = jnp.dot(plane_ref[pl.ds(off_kh[0], M2), :], w2_ref[0],
                               preferred_element_type=jnp.float32)
        acc_ref[...] += jnp.dot(plane_ref[pl.ds(off_kh[1], M2), :], w2_ref[1],
                                preferred_element_type=jnp.float32)
        acc_ref[...] += jnp.dot(plane_ref[pl.ds(off_kh[2], M2), :], w2_ref[2],
                                preferred_element_type=jnp.float32)
        y = acc_ref[...] + b2_ref[...]
        y = jnp.maximum(y, 0.1 * y)                     # LeakyReLU(0.1)
        out_ref[...] = y.astype(out_ref.dtype)

    return kernel


def fused_downsample_convs(patch, w1bd, w2f, b2, *, TR, OW2, Ep):
    B, n_tiles, M1, K1 = patch.shape
    M2 = TR * OW2
    E3 = 3 * Ep
    CM = min(M1, 1024)        # conv1 M-chunk: bounds the f32 matmul temp to ~1.5 MB
    kernel = _make_kernel(TR, OW2, M1, CM)
    return pl.pallas_call(
        kernel,
        out_shape=jax.ShapeDtypeStruct((B, n_tiles * M2, Ep), jnp.bfloat16),
        grid_spec=pltpu.PrefetchScalarGridSpec(
            num_scalar_prefetch=0,
            grid=(B, n_tiles),
            in_specs=[
                pl.BlockSpec((None, None, M1, K1), lambda b, t: (b, t, 0, 0)),
                pl.BlockSpec((K1, E3), lambda b, t: (0, 0)),        # resident
                pl.BlockSpec((3, E3, Ep), lambda b, t: (0, 0, 0)),  # resident
                pl.BlockSpec((1, Ep), lambda b, t: (0, 0)),         # resident
            ],
            out_specs=pl.BlockSpec((None, M2, Ep), lambda b, t: (b, t, 0)),
            scratch_shapes=[
                pltpu.VMEM((M1, E3), jnp.bfloat16),   # fused h1 (VMEM-only)
                pltpu.VMEM((M2, Ep), jnp.float32),    # conv2 accumulator
            ],
        ),
        compiler_params=pltpu.CompilerParams(
            dimension_semantics=("parallel", "parallel"),
            vmem_limit_bytes=48 * 1024 * 1024,
        ),
    )(patch, w1bd, w2f, b2)


# ----------------------------------------------------------------------------
# Parameter init (nn.Conv default-init shapes) and one-time packing (hoisted)
# ----------------------------------------------------------------------------
def init_params(key, edim, in_ch=3):
    k1, k2, k3, k4 = jax.random.split(key, 4)
    fan1 = in_ch * 9
    fan2 = edim * 9
    w1 = jax.random.uniform(k1, (edim, in_ch, 3, 3), jnp.float32,
                            -1.0 / jnp.sqrt(fan1), 1.0 / jnp.sqrt(fan1))
    b1 = jax.random.uniform(k2, (edim,), jnp.float32,
                            -1.0 / jnp.sqrt(fan1), 1.0 / jnp.sqrt(fan1))
    w2 = jax.random.uniform(k3, (edim, edim, 3, 3), jnp.float32,
                            -1.0 / jnp.sqrt(fan2), 1.0 / jnp.sqrt(fan2))
    b2 = jax.random.uniform(k4, (edim,), jnp.float32,
                            -1.0 / jnp.sqrt(fan2), 1.0 / jnp.sqrt(fan2))
    return dict(w1=w1, b1=b1, w2=w2, b2=b2)


def prepare_params(params, edim, in_ch=3):
    """Pack weights once.
    conv1 -> block-diagonal (3 column slots) weight (3*KS, 3*Ep) with the bias as
    the last row of each slot (driven by a constant-1 feature).
    conv2 -> per-kh weight (3, 3*Ep, Ep) with the 3 kw taps folded along K.
    Channels are zero-padded to Ep = round_up(edim,128) -> lane-dense stores."""
    Ep = _round_up(edim, 128)
    KS = 9 * in_ch + 1
    # conv1: rows ordered (kh,kw,c) to match the wrapper's im2col concat order
    w1_flat = jnp.transpose(params["w1"], (2, 3, 1, 0)).reshape(9 * in_ch, edim)
    w1_blk = jnp.concatenate([w1_flat, params["b1"].reshape(1, edim)], axis=0)   # (KS, edim)
    w1_blk = jnp.pad(w1_blk, ((0, 0), (0, Ep - edim)))
    w1bd = jnp.zeros((3 * KS, 3 * Ep), jnp.float32)
    for u in range(3):
        w1bd = w1bd.at[u * KS:(u + 1) * KS, u * Ep:(u + 1) * Ep].set(w1_blk)
    w1bd = w1bd.astype(jnp.bfloat16)
    # conv2: (kh, kw, ei, eo) -> (3, 3*Ep, Ep), rows = kw*Ep + ei
    w2_t = jnp.transpose(params["w2"], (2, 3, 1, 0))
    w2_t = jnp.pad(w2_t, ((0, 0), (0, 0), (0, Ep - edim), (0, Ep - edim)))
    w2f = w2_t.reshape(3, 3 * Ep, Ep).astype(jnp.bfloat16)
    b2 = jnp.pad(params["b2"], (0, Ep - edim)).reshape(1, Ep).astype(jnp.float32)
    return dict(w1bd=w1bd, w2f=w2f, b2=b2)


# ----------------------------------------------------------------------------
# RSTBInput forward:  vid (N, D, C, H, W) -> (N, D, edim, H//4, W//4)
# ----------------------------------------------------------------------------
def rstb_input_forward(vid, pparams, *, edim, row_tile=None):
    N, D, C, H, W = vid.shape
    assert H % 4 == 0 and W % 4 == 0  # TODO(synk): odd H/W unsupported (see header)
    B = N * D
    OH1, OW1 = H // 2, W // 2
    OH2, OW2 = H // 4, W // 4
    Ep = pparams["w2f"].shape[-1]
    KS = pparams["w1bd"].shape[0] // 3
    assert KS == 9 * C + 1

    TR = row_tile if row_tile is not None else _pick_row_tile(OH2, OW2)
    assert OH2 % TR == 0
    n_tiles = OH2 // TR
    RPT = 2 * TR + 1

    x = vid.reshape(B, C, H, W).transpose(0, 2, 3, 1).astype(jnp.bfloat16)   # B H W C
    xp = jnp.pad(x, ((0, 0), (1, 1), (1, 1), (0, 0)))

    # conv1 im2col (9*C taps, (kh,kw,c) order) + constant-1 feature carrying the bias
    taps = [xp[:, kh:kh + 2 * OH1:2, kw:kw + 2 * OW1:2, :]
            for kh in range(3) for kw in range(3)]
    ones = jnp.ones((B, OH1, OW1, 1), jnp.bfloat16)
    col1 = jnp.concatenate(taps + [ones], axis=-1)                 # (B, OH1, OW1, KS)
    # h1_pad's zero column on the left (flag=0 -> exact zero after LeakyReLU)
    col1 = jnp.pad(col1, ((0, 0), (0, 0), (1, 0), (0, 0)))         # (B, OH1, OW1+1, KS)
    # fold the three conv2 column taps (h1_pad cols 2s, 2s+1, 2s+2) along features
    trip = jnp.concatenate(
        [col1[:, :, 0:OW1:2, :],
         col1[:, :, 1:OW1:2, :],
         col1[:, :, 2:OW1 + 1:2, :]],
        axis=-1)                                                   # (B, OH1, OW2, 3*KS)
    # h1_pad's zero row on top
    trip = jnp.pad(trip, ((0, 0), (1, 0), (0, 0), (0, 0)))         # (B, OH1+1, OW2, 3*KS)

    # per-row-tile gather: TR+1 even h1_pad rows first, then TR odd rows
    # (1-row halo duplicated between tiles so BlockSpecs stay non-overlapping)
    base = (2 * TR) * np.arange(n_tiles)[:, None]
    qrows = np.concatenate([2 * np.arange(TR + 1), 2 * np.arange(TR) + 1])
    idx = jnp.asarray((base + qrows[None, :]).reshape(-1))
    patch = jnp.take(trip, idx, axis=1)                            # (B, n_tiles*RPT, OW2, 3KS)
    patch = patch.reshape(B, n_tiles, RPT * OW2, 3 * KS)

    h2 = fused_downsample_convs(patch, pparams["w1bd"], pparams["w2f"], pparams["b2"],
                                TR=TR, OW2=OW2, Ep=Ep)             # (B, OH2*OW2, Ep) bf16
    h2 = h2.reshape(B, OH2, OW2, Ep)
    # TODO(synk): keep channels-last for the (unimplemented) downstream RSTB stage
    # to elide this slice + transpose; kept to match 'n c d h w -> n d c h w'.
    out = h2[..., :edim].transpose(0, 3, 1, 2).reshape(N, D, edim, OH2, OW2)
    # TODO(synk): RSTBWithInputConv stage omitted (definition not provided).
    return out.astype(vid.dtype)


# ----------------------------------------------------------------------------
# Pure-JAX f32 reference (for correctness check)
# ----------------------------------------------------------------------------
def _conv_ref(x_bhwc, w_oihw, bias):
    B, H, W, C = x_bhwc.shape
    OH, OW = H // 2, W // 2
    xp = jnp.pad(x_bhwc, ((0, 0), (1, 1), (1, 1), (0, 0)))
    wk = jnp.transpose(w_oihw, (2, 3, 1, 0)).astype(jnp.float32)   # (3,3,Cin,Cout)
    y = jnp.zeros((B, OH, OW, w_oihw.shape[0]), jnp.float32)
    for kh in range(3):
        for kw in range(3):
            xt = xp[:, kh:kh + 2 * OH:2, kw:kw + 2 * OW:2, :].astype(jnp.float32)
            y = y + jnp.einsum('bhwc,ce->bhwe', xt, wk[kh, kw])
    y = y + bias.reshape(1, 1, 1, -1)
    return jnp.maximum(y, 0.1 * y)


def rstb_input_ref(vid, params):
    N, D, C, H, W = vid.shape
    x = vid.reshape(N * D, C, H, W).transpose(0, 2, 3, 1)
    h1 = _conv_ref(x, params["w1"], params["b1"])
    h2 = _conv_ref(h1, params["w2"], params["b2"])
    E = h2.shape[-1]
    return h2.transpose(0, 3, 1, 2).reshape(N, D, E, H // 4, W // 4)


if __name__ == "__main__":
    key = jax.random.PRNGKey(0)
    kx, kp = jax.random.split(key)
    N, D, C, H, W = 2, 3, 3, 16, 16
    edim = 32
    vid = jax.random.normal(kx, (N, D, C, H, W), jnp.float32)
    params = init_params(kp, edim, in_ch=C)
    pparams = prepare_params(params, edim, in_ch=C)

    fwd = jax.jit(rstb_input_forward, static_argnames=("edim",))
    out = jax.block_until_ready(fwd(vid, pparams, edim=edim))

    assert out.shape == (N, D, edim, H // 4, W // 4), out.shape
    assert bool(jnp.all(jnp.isfinite(out)))

    ref = rstb_input_ref(vid, params)
    err = float(jnp.max(jnp.abs(out.astype(jnp.float32) - ref)))
    scale = float(jnp.max(jnp.abs(ref))) + 1e-6
    assert err / scale < 5e-2, (err, scale)

    print("KERNEL_OK")
</pallas_src>

<mosaic_0001>
module attributes {stable_mosaic.version = 11 : i64} {
  func.func @kernel(%arg0: i32, %arg1: i32, %arg2: memref<1x1x36x84xbf16, #tpu.memory_space<vmem>>, %arg3: memref<84x384xbf16, #tpu.memory_space<vmem>>, %arg4: memref<3x384x128xbf16, #tpu.memory_space<vmem>>, %arg5: memref<1x128xf32, #tpu.memory_space<vmem>>, %arg6: memref<1x16x128xbf16, #tpu.memory_space<vmem>>, %arg7: memref<36x384xbf16, #tpu.memory_space<vmem>>, %arg8: memref<16x128xf32, #tpu.memory_space<vmem>>) attributes {dimension_semantics = [#tpu.dimension_semantics<parallel>, #tpu.dimension_semantics<parallel>], iteration_bounds = array<i64: 6, 1>, scalar_prefetch = 0 : i64, scratch_operands = 2 : i64, tpu.core_type = #tpu.core_type<tc>, window_params = [{transform_indices = @transform_0, window_bounds = array<i64: 1, 1, 36, 84>}, {pipeline_mode = #tpu.pipeline_mode<synchronous>, transform_indices = @transform_1, window_bounds = array<i64: 84, 384>}, {pipeline_mode = #tpu.pipeline_mode<synchronous>, transform_indices = @transform_2, window_bounds = array<i64: 3, 384, 128>}, {pipeline_mode = #tpu.pipeline_mode<synchronous>, transform_indices = @transform_3, window_bounds = array<i64: 1, 128>}, {transform_indices = @transform_4, window_bounds = array<i64: 1, 16, 128>}]} {
    %c0 = arith.constant 0 : index
    %c0_0 = arith.constant 0 : index
    %c0_1 = arith.constant 0 : index
    %c0_2 = arith.constant 0 : index
    %0 = vector.load %arg2[%c0, %c0_0, %c0_1, %c0_2] : memref<1x1x36x84xbf16, #tpu.memory_space<vmem>>, vector<1x1x36x84xbf16>
    %1 = vector.shape_cast %0 : vector<1x1x36x84xbf16> to vector<36x84xbf16>
    %c0_3 = arith.constant 0 : index
    %c0_4 = arith.constant 0 : index
    %2 = vector.load %arg3[%c0_3, %c0_4] : memref<84x384xbf16, #tpu.memory_space<vmem>>, vector<84x384xbf16>
    %cst = arith.constant dense<0.000000e+00> : vector<36x384xf32>
    %3 = tpu.matmul %1, %2, %cst {dimension_numbers = #tpu.dot_dimension_numbers<[1], [0], [0], [1], [0, 0, 1, 1], [], []>} : vector<36x84xbf16>, vector<84x384xbf16>, vector<36x384xf32> -> vector<36x384xf32>
    %cst_5 = arith.constant 1.000000e-01 : f32
    %4 = vector.broadcast %cst_5 : f32 to vector<36x384xf32>
    %5 = arith.mulf %4, %3 : vector<36x384xf32>
    %6 = arith.maximumf %3, %5 : vector<36x384xf32>
    %7 = arith.truncf %6 : vector<36x384xf32> to vector<36x384xbf16>
    %c0_6 = arith.constant 0 : index
    %c0_7 = arith.constant 0 : index
    %8 = vector.load %arg7[%c0_6, %c0_7] : memref<36x384xbf16, #tpu.memory_space<vmem>>, vector<36x384xbf16>
    tpu.vector_store %arg7[%c0_6, %c0_7], %7 {strides = array<i32>} : memref<36x384xbf16, #tpu.memory_space<vmem>>, vector<36x384xbf16>,
    %c0_8 = arith.constant 0 : index
    %c0_9 = arith.constant 0 : index
    %9 = vector.load %arg7[%c0_8, %c0_9] : memref<36x384xbf16, #tpu.memory_space<vmem>>, vector<16x384xbf16>
    %c0_10 = arith.constant 0 : index
    %c0_11 = arith.constant 0 : index
    %c0_12 = arith.constant 0 : index
    %10 = vector.load %arg4[%c0_10, %c0_11, %c0_12] : memref<3x384x128xbf16, #tpu.memory_space<vmem>>, vector<1x384x128xbf16>
    %11 = vector.shape_cast %10 : vector<1x384x128xbf16> to vector<384x128xbf16>
    %cst_13 = arith.constant dense<0.000000e+00> : vector<16x128xf32>
    %12 = tpu.matmul %9, %11, %cst_13 {dimension_numbers = #tpu.dot_dimension_numbers<[1], [0], [0], [1], [0, 0, 1, 1], [], []>} : vector<16x384xbf16>, vector<384x128xbf16>, vector<16x128xf32> -> vector<16x128xf32>
    %c0_14 = arith.constant 0 : index
    %c0_15 = arith.constant 0 : index
    %13 = vector.load %arg8[%c0_14, %c0_15] : memref<16x128xf32, #tpu.memory_space<vmem>>, vector<16x128xf32>
    tpu.vector_store %arg8[%c0_14, %c0_15], %12 {strides = array<i32>} : memref<16x128xf32, #tpu.memory_space<vmem>>, vector<16x128xf32>,
    %c0_16 = arith.constant 0 : index
    %c0_17 = arith.constant 0 : index
    %14 = vector.load %arg8[%c0_16, %c0_17] : memref<16x128xf32, #tpu.memory_space<vmem>>, vector<16x128xf32>
    %c20 = arith.constant 20 : index
    %c0_18 = arith.constant 0 : index
    %15 = vector.load %arg7[%c20, %c0_18] : memref<36x384xbf16, #tpu.memory_space<vmem>>, vector<16x384xbf16>
    %c1 = arith.constant 1 : index
    %c0_19 = arith.constant 0 : index
    %c0_20 = arith.constant 0 : index
    %16 = vector.load %arg4[%c1, %c0_19, %c0_20] : memref<3x384x128xbf16, #tpu.memory_space<vmem>>, vector<1x384x128xbf16>
    %17 = vector.shape_cast %16 : vector<1x384x128xbf16> to vector<384x128xbf16>
    %cst_21 = arith.constant dense<0.000000e+00> : vector<16x128xf32>
    %18 = tpu.matmul %15, %17, %cst_21 {dimension_numbers = #tpu.dot_dimension_numbers<[1], [0], [0], [1], [0, 0, 1, 1], [], []>} : vector<16x384xbf16>, vector<384x128xbf16>, vector<16x128xf32> -> vector<16x128xf32>
    %19 = arith.addf %14, %18 : vector<16x128xf32>
    %c0_22 = arith.constant 0 : index
    %c0_23 = arith.constant 0 : index
    %20 = vector.load %arg8[%c0_22, %c0_23] : memref<16x128xf32, #tpu.memory_space<vmem>>, vector<16x128xf32>
    tpu.vector_store %arg8[%c0_22, %c0_23], %19 {strides = array<i32>} : memref<16x128xf32, #tpu.memory_space<vmem>>, vector<16x128xf32>,
    %c0_24 = arith.constant 0 : index
    %c0_25 = arith.constant 0 : index
    %21 = vector.load %arg8[%c0_24, %c0_25] : memref<16x128xf32, #tpu.memory_space<vmem>>, vector<16x128xf32>
    %c4 = arith.constant 4 : index
    %c0_26 = arith.constant 0 : index
    %22 = vector.load %arg7[%c4, %c0_26] : memref<36x384xbf16, #tpu.memory_space<vmem>>, vector<16x384xbf16>
    %c2 = arith.constant 2 : index
    %c0_27 = arith.constant 0 : index
    %c0_28 = arith.constant 0 : index
    %23 = vector.load %arg4[%c2, %c0_27, %c0_28] : memref<3x384x128xbf16, #tpu.memory_space<vmem>>, vector<1x384x128xbf16>
    %24 = vector.shape_cast %23 : vector<1x384x128xbf16> to vector<384x128xbf16>
    %cst_29 = arith.constant dense<0.000000e+00> : vector<16x128xf32>
    %25 = tpu.matmul %22, %24, %cst_29 {dimension_numbers = #tpu.dot_dimension_numbers<[1], [0], [0], [1], [0, 0, 1, 1], [], []>} : vector<16x384xbf16>, vector<384x128xbf16>, vector<16x128xf32> -> vector<16x128xf32>
    %26 = arith.addf %21, %25 : vector<16x128xf32>
    %c0_30 = arith.constant 0 : index
    %c0_31 = arith.constant 0 : index
    %27 = vector.load %arg8[%c0_30, %c0_31] : memref<16x128xf32, #tpu.memory_space<vmem>>, vector<16x128xf32>
    tpu.vector_store %arg8[%c0_30, %c0_31], %26 {strides = array<i32>} : memref<16x128xf32, #tpu.memory_space<vmem>>, vector<16x128xf32>,
    %c0_32 = arith.constant 0 : index
    %c0_33 = arith.constant 0 : index
    %28 = vector.load %arg8[%c0_32, %c0_33] : memref<16x128xf32, #tpu.memory_space<vmem>>, vector<16x128xf32>
    %c0_34 = arith.constant 0 : index
    %c0_35 = arith.constant 0 : index
    %29 = vector.load %arg5[%c0_34, %c0_35] : memref<1x128xf32, #tpu.memory_space<vmem>>, vector<1x128xf32>
    %30 = vector.broadcast %29 : vector<1x128xf32> to vector<16x128xf32>
    %31 = arith.addf %28, %30 : vector<16x128xf32>
    %cst_36 = arith.constant 1.000000e-01 : f32
    %32 = vector.broadcast %cst_36 : f32 to vector<16x128xf32>
    %33 = arith.mulf %32, %31 : vector<16x128xf32>
    %34 = arith.maximumf %31, %33 : vector<16x128xf32>
    %35 = arith.truncf %34 : vector<16x128xf32> to vector<16x128xbf16>
    %c0_37 = arith.constant 0 : index
    %c0_38 = arith.constant 0 : index
    %c0_39 = arith.constant 0 : index
    %36 = vector.load %arg6[%c0_37, %c0_38, %c0_39] : memref<1x16x128xbf16, #tpu.memory_space<vmem>>, vector<1x16x128xbf16>
    %37 = vector.shape_cast %36 : vector<1x16x128xbf16> to vector<16x128xbf16>
    %38 = vector.shape_cast %35 : vector<16x128xbf16> to vector<1x16x128xbf16>
    tpu.vector_store %arg6[%c0_37, %c0_38, %c0_39], %38 {strides = array<i32>} : memref<1x16x128xbf16, #tpu.memory_space<vmem>>, vector<1x16x128xbf16>,
    return
  }
  func.func @transform_0(%arg0: i32, %arg1: i32) -> (i32, i32, i32, i32) {
    %c0_i32 = arith.constant 0 : i32
    %c0_i32_0 = arith.constant 0 : i32
    %c0_i32_1 = arith.constant 0 : i32
    return %arg0, %arg1, %c0_i32, %c0_i32_0 : i32, i32, i32, i32
  }
  func.func @transform_1(%arg0: i32, %arg1: i32) -> (i32, i32) {
    %c0_i32 = arith.constant 0 : i32
    %c0_i32_0 = arith.constant 0 : i32
    %c0_i32_1 = arith.constant 0 : i32
    return %c0_i32, %c0_i32_0 : i32, i32
  }
  func.func @transform_2(%arg0: i32, %arg1: i32) -> (i32, i32, i32) {
    %c0_i32 = arith.constant 0 : i32
    %c0_i32_0 = arith.constant 0 : i32
    %c0_i32_1 = arith.constant 0 : i32
    %c0_i32_2 = arith.constant 0 : i32
    return %c0_i32, %c0_i32_0, %c0_i32_1 : i32, i32, i32
  }
  func.func @transform_3(%arg0: i32, %arg1: i32) -> (i32, i32) {
    %c0_i32 = arith.constant 0 : i32
    %c0_i32_0 = arith.constant 0 : i32
    %c0_i32_1 = arith.constant 0 : i32
    return %c0_i32, %c0_i32_0 : i32, i32
  }
  func.func @transform_4(%arg0: i32, %arg1: i32) -> (i32, i32, i32) {
    %c0_i32 = arith.constant 0 : i32
    %c0_i32_0 = arith.constant 0 : i32
    return %arg0, %arg1, %c0_i32 : i32, i32, i32
  }
}

</mosaic_0001>

<llo_original>
// kernel: rstb_input_forward.1
$region0: #{rstb_input_forward.1}
  #allocation0 [shape = 'u32[]', space=smem, size = 0x4, offset = 0x4, fixed_abs, tag = 'smem constant byte address 0x4 - core index']
  #allocation1 [shape = 'u32[72,128]{1,0:T(1,128)}', space=vmem, size = 0x9000, scoped, tag = 'internal scratch']
  #allocation2 [shape = 'bf16[36,384]{1,0:T(8,128)(2,1)}', space=vmem, size = 0x7800, scoped, tag = 'scratch operand']
  #allocation3 [shape = 'f32[16,128]{1,0:T(8,128)}', space=vmem, size = 0x2000, scoped, tag = 'scratch operand']
  %s0 = inlined_call_operand.vmem [shape: bf16[6,1,36,84], index: 0, kind: input, shape index: {}]
  %s1 = inlined_call_operand.vmem [shape: bf16[84,384], index: 1, kind: input, shape index: {}]
  %s2 = inlined_call_operand.vmem [shape: bf16[3,384,128], index: 2, kind: input, shape index: {}]
  %s3 = inlined_call_operand.vmem [shape: f32[1,128], index: 3, kind: input, shape index: {}]
  %s4 = inlined_call_operand.vmem [shape: bf16[6,16,128], index: 4, kind: output, shape index: {}]
  %s5 = sld [smem:[#allocation0]]
  $region49: #{rstb_input_forward.1} parent=0
    _
  %s7 = ssub.s32 1, %s5
  %s8 = scalar_select 0, %s7, %s5
  loop: start=0, step=1, limit=8
  $region2: #{rstb_input_forward.1} parent=0 // loop_pre_header
    _
  $region3: #{rstb_input_forward.1} parent=0 // loop_header
    %s10 = sphi 0, %s14
    %p11 = scmp.ge.s32.totalorder %s10, 8
    %s17 = sphi 0, %s29
    %s18 = sphi 0, %s25
    %s19 = sphi 0, %s17
    %s20 = sphi 0, %s18
    %s21 = sphi 0, %s19
    %s22 = sphi 0, %s20
    %s34 = sphi 0, %s36
    %s37 = sphi 0, %s34
    %s38 = sphi 0, %s37
    %s54 = sphi 0, %s38
    %s58 = sphi 0, %s58
    %s60 = sphi 0, %s58
    %s61 = sphi 0, %s60
    %s75 = sphi 0, %s61
    %s79 = sphi 0, %s79
    %s81 = sphi 0, %s79
    %s82 = sphi 0, %s81
    %s96 = sphi 0, %s82
    %s100 = sphi 0, %s100
    %s102 = sphi 0, %s100
    %s103 = sphi 0, %s102
    %s117 = sphi 0, %s103
    %s125 = sphi 0, %s127
    %s128 = sphi 0, %s125
    %s129 = sphi 0, %s128
    %s145 = sphi 0, %s129
  $region4: #{rstb_input_forward.1} parent=0 // loop_header_branch
    %13 = sbr.rel (%p11) target = $region8
  $region5: #{rstb_input_forward.1} parent=0 // loop_body
    %s15 = ssub.s32 %s10, 1
    %s16 = ssub.s32 %s10, 2
    %s23 = sadd.s32 1, %s18
    %p24 = scmp.ge.s32.totalorder %s23, 1
    %s25 = scalar_select %p24, 0, %s23
    %s26 = sadd.s32 1, %s17
    %s27 = scalar_select %p24, %s26, %s17
    %p28 = scmp.ge.s32.totalorder %s27, 6
    %s29 = scalar_select %p28, 0, %s27
    %s30 = ssub.s32 %s17, %s29
    %s31 = ssub.s32 %s18, %s25
    %s32 = sor.u32 %s30, %s31
    %p33 = scmp.eq.s32.totalorder %s32, 0
    %s35 = sadd.s32 %s34, 1
    %s36 = scalar_select %p33, %s34, %s35
    %p39 = pneg %p33
    %p40 = scmp.eq.s32.totalorder %s10, 5
    %p41 = por %p39, %p40
    %p42 = scmp.ne.s32.totalorder %s34, %s37
    %p43 = scmp.eq.s32.totalorder %s10, 0
    %p44 = por %p42, %p43
    %p45 = scmp.ne.s32.totalorder %s34, %s37
    %p46 = scmp.eq.s32.totalorder %s15, 5
    %p47 = por %p45, %p46
    %p48 = scmp.ne.s32.totalorder %s37, %s38
    %p49 = scmp.eq.s32.totalorder %s15, 0
    %p50 = por %p48, %p49
    %p51 = scmp.ne.s32.totalorder %s37, %s38
    %p52 = scmp.eq.s32.totalorder %s16, 5
    %p53 = por %p51, %p52
    %p55 = scmp.ne.s32.totalorder %s38, %s54
    %p56 = scmp.eq.s32.totalorder %s16, 0
    %p57 = por %p55, %p56
    %s59 = sadd.s32 %s58, 1
    %p62 = scmp.eq.s32.totalorder %s10, 5
    %p63 = scmp.ne.s32.totalorder %s58, %s60
    %p64 = scmp.eq.s32.totalorder %s10, 0
    %p65 = por %p63, %p64
    %p66 = scmp.ne.s32.totalorder %s58, %s60
    %p67 = scmp.eq.s32.totalorder %s15, 5
    %p68 = por %p66, %p67
    %p69 = scmp.ne.s32.totalorder %s60, %s61
    %p70 = scmp.eq.s32.totalorder %s15, 0
    %p71 = por %p69, %p70
    %p72 = scmp.ne.s32.totalorder %s60, %s61
    %p73 = scmp.eq.s32.totalorder %s16, 5
    %p74 = por %p72, %p73
    %p76 = scmp.ne.s32.totalorder %s61, %s75
    %p77 = scmp.eq.s32.totalorder %s16, 0
    %p78 = por %p76, %p77
    %s80 = sadd.s32 %s79, 1
    %p83 = scmp.eq.s32.totalorder %s10, 5
    %p84 = scmp.ne.s32.totalorder %s79, %s81
    %p85 = scmp.eq.s32.totalorder %s10, 0
    %p86 = por %p84, %p85
    %p87 = scmp.ne.s32.totalorder %s79, %s81
    %p88 = scmp.eq.s32.totalorder %s15, 5
    %p89 = por %p87, %p88
    %p90 = scmp.ne.s32.totalorder %s81, %s82
    %p91 = scmp.eq.s32.totalorder %s15, 0
    %p92 = por %p90, %p91
    %p93 = scmp.ne.s32.totalorder %s81, %s82
    %p94 = scmp.eq.s32.totalorder %s16, 5
    %p95 = por %p93, %p94
    %p97 = scmp.ne.s32.totalorder %s82, %s96
    %p98 = scmp.eq.s32.totalorder %s16, 0
    %p99 = por %p97, %p98
    %s101 = sadd.s32 %s100, 1
    %p104 = scmp.eq.s32.totalorder %s10, 5
    %p105 = scmp.ne.s32.totalorder %s100, %s102
    %p106 = scmp.eq.s32.totalorder %s10, 0
    %p107 = por %p105, %p106
    %p108 = scmp.ne.s32.totalorder %s100, %s102
    %p109 = scmp.eq.s32.totalorder %s15, 5
    %p110 = por %p108, %p109
    %p111 = scmp.ne.s32.totalorder %s102, %s103
    %p112 = scmp.eq.s32.totalorder %s15, 0
    %p113 = por %p111, %p112
    %p114 = scmp.ne.s32.totalorder %s102, %s103
    %p115 = scmp.eq.s32.totalorder %s16, 5
    %p116 = por %p114, %p115
    %p118 = scmp.ne.s32.totalorder %s103, %s117
    %p119 = scmp.eq.s32.totalorder %s16, 0
    %p120 = por %p118, %p119
    %s121 = ssub.s32 %s17, %s29
    %s122 = ssub.s32 %s18, %s25
    %s123 = sor.u32 %s121, %s122
    %p124 = scmp.eq.s32.totalorder %s123, 0
    %s126 = sadd.s32 %s125, 1
    %s127 = scalar_select %p124, %s125, %s126
    %p130 = pneg %p124
    %p131 = scmp.eq.s32.totalorder %s10, 5
    %p132 = por %p130, %p131
    %p133 = scmp.ne.s32.totalorder %s125, %s128
    %p134 = scmp.eq.s32.totalorder %s10, 0
    %p135 = por %p133, %p134
    %p136 = scmp.ne.s32.totalorder %s125, %s128
    %p137 = scmp.eq.s32.totalorder %s15, 5
    %p138 = por %p136, %p137
    %p139 = scmp.ne.s32.totalorder %s128, %s129
    %p140 = scmp.eq.s32.totalorder %s15, 0
    %p141 = por %p139, %p140
    %p142 = scmp.ne.s32.totalorder %s128, %s129
    %p143 = scmp.eq.s32.totalorder %s16, 5
    %p144 = por %p142, %p143
    %p146 = scmp.ne.s32.totalorder %s129, %s145
    %p147 = scmp.eq.s32.totalorder %s16, 0
    %p148 = por %p146, %p147
    %p149 = scmp.le.s32.totalorder 1, %s10
    %p150 = scmp.lt.s32.totalorder %s10, 7
    %p151 = pnand %p149, %p150
    %p152 = pneg %p151
    // Predicated region
    $region9: #{rstb_input_forward.1} parent=5 // pred_check
      _
    $region10: #{rstb_input_forward.1} parent=5 // pred_check_branch
      %154 = sbr.rel (%p151) target = $region12
    $region11: #{rstb_input_forward.1} parent=5 // pred_region
      %s155 = ssub.s32 %s10, 1
      // Predicated region
      $region13: #{rstb_input_forward.1} parent=11 // pred_check
        %p156 = pneg %p71
      $region14: #{rstb_input_forward.1} parent=11 // pred_check_branch
        %158 = sbr.rel (%p156) target = $region16
      $region15: #{rstb_input_forward.1} parent=11 // pred_region
        _
      $region16: #{rstb_input_forward.1} parent=11 // pred_fallthru
        _
      // Predicated region
      $region17: #{rstb_input_forward.1} parent=11 // pred_check
        %p159 = pneg %p92
      $region18: #{rstb_input_forward.1} parent=11 // pred_check_branch
        %161 = sbr.rel (%p159) target = $region20
      $region19: #{rstb_input_forward.1} parent=11 // pred_region
        _
      $region20: #{rstb_input_forward.1} parent=11 // pred_fallthru
        _
      // Predicated region
      $region21: #{rstb_input_forward.1} parent=11 // pred_check
        %p162 = pneg %p113
      $region22: #{rstb_input_forward.1} parent=11 // pred_check_branch
        %164 = sbr.rel (%p162) target = $region24
      $region23: #{rstb_input_forward.1} parent=11 // pred_region
        _
      $region24: #{rstb_input_forward.1} parent=11 // pred_fallthru
        _
    $region12: #{rstb_input_forward.1} parent=5 // pred_fallthru
      _
    %p165 = scmp.lt.s32.totalorder %s10, 6
    // Predicated region
    $region25: #{rstb_input_forward.1} parent=5 // pred_check
      %p166 = pneg %p165
    $region26: #{rstb_input_forward.1} parent=5 // pred_check_branch
      %168 = sbr.rel (%p166) target = $region28
    $region27: #{rstb_input_forward.1} parent=5 // pred_region
      // Predicated region
      $region29: #{rstb_input_forward.1} parent=27 // pred_check
        %p169 = pneg %p44
      $region30: #{rstb_input_forward.1} parent=27 // pred_check_branch
        %171 = sbr.rel (%p169) target = $region32
      $region31: #{rstb_input_forward.1} parent=27 // pred_region
        %p172 = scmp.lt.s32.totalorder %s17, 5
        %s173 = scalar_select %p172, %s17, 5
        %p174 = scmp.lt.s32.totalorder %s18, 0
        %s175 = scalar_select %p174, %s18, 0
        %s176 = smul.addr %s175, 5
        %s177 = smul.addr %s173, 5
        %s178 = sadd.s32 %s176, %s177
        %s179 = smul.addr %s178, 4
        %s180 = scalar_lea.vmem %s0, %s179
      $region32: #{rstb_input_forward.1} parent=27 // pred_fallthru
        _
    $region28: #{rstb_input_forward.1} parent=5 // pred_fallthru
      _
    %p181 = scmp.le.s32.totalorder 1, %s10
    %p182 = scmp.lt.s32.totalorder %s10, 7
    %p183 = pnand %p181, %p182
    %p184 = pneg %p183
    // Predicated region
    $region33: #{rstb_input_forward.1} parent=5 // pred_check
      _
    $region34: #{rstb_input_forward.1} parent=5 // pred_check_branch
      %186 = sbr.rel (%p183) target = $region36
    $region35: #{rstb_input_forward.1} parent=5 // pred_region
      %s187 = ssub.s32 %s10, 1
      %p188 = scmp.lt.s32.totalorder %s19, 5
      %s189 = scalar_select %p188, %s19, 5
      %p190 = scmp.lt.s32.totalorder %s20, 0
      %s191 = scalar_select %p190, %s20, 0
      %s192 = smul.addr %s191, 5
      %s193 = smul.addr %s189, 5
      %s194 = sadd.s32 %s192, %s193
      %s195 = smul.addr %s194, 4
      %s196 = scalar_lea.vmem %s0, %s195
      %p197 = pneg %p50
      %p198 = pneg %p47
      %p199 = pneg %p71
      %p200 = pneg %p68
      %p201 = pneg %p92
      %p202 = pneg %p89
      %p203 = pneg %p113
      %p204 = pneg %p110
      %p205 = pneg %p141
      %p206 = pneg %p138
      %s207 = smul.u32 2, %s20
      %p208 = scmp.lt.s32.totalorder %s19, 5
      %s209 = scalar_select %p208, %s19, 5
      %p210 = scmp.lt.s32.totalorder %s207, 1
      %s211 = scalar_select %p210, %s207, 1
      %s212 = smul.addr %s209, 2
      %s213 = sadd.s32 %s211, %s212
      %s214 = smul.addr %s213, 4
      %s215 = scalar_lea.vmem %s4, %s214
      %p216 = scmp.lt.s32.totalorder %s19, 5
      %s217 = scalar_select %p216, %s19, 5
      %p218 = scmp.lt.s32.totalorder %s20, 0
      %s219 = scalar_select %p218, %s20, 0
      %s220 = smul.addr %s219, 5
      %s221 = smul.addr %s217, 5
      %s222 = sadd.s32 %s220, %s221
      %s223 = smul.addr %s222, 4
      %s224 = scalar_lea.vmem %s0, %s223
      %s225 = smul.u32 2, %s20
      %p226 = scmp.lt.s32.totalorder %s19, 5
      %s227 = scalar_select %p226, %s19, 5
      %p228 = scmp.lt.s32.totalorder %s225, 1
      %s229 = scalar_select %p228, %s225, 1
      %s230 = smul.addr %s227, 2
      %s231 = sadd.s32 %s229, %s230
      %s232 = smul.addr %s231, 4
      %s233 = scalar_lea.vmem %s4, %s232
      %s234 = smul.u32 2, %s20
      %v236 = vld [vmem:[%s224] sm:$0xf]
      %v237 = vld [vmem:[%s224 + $0x4] sm:$0xf]
      %v238 = vld [vmem:[%s224 + $0x8] sm:$0xf]
      %v239 = vld [vmem:[%s224 + $0xc] sm:$0xf]
      %v240 = vld [vmem:[%s224 + $0x10] sm:$0x3]
      %v241 = vld [vmem:[%s1] sm:$0xff]
      %v242 = vld [vmem:[%s1 + $0x8] sm:$0xf]
      %v243 = vld [vmem:[%s1 + $0xc] sm:$0xff]
      %v244 = vld [vmem:[%s1 + $0x14] sm:$0xf]
      %v245 = vld [vmem:[%s1 + $0x18] sm:$0xff]
      %v246 = vld [vmem:[%s1 + $0x20] sm:$0xf]
      %v247 = vld [vmem:[%s1 + $0x24] sm:$0xff]
      %v248 = vld [vmem:[%s1 + $0x2c] sm:$0xf]
      %v249 = vld [vmem:[%s1 + $0x30] sm:$0xff]
      %v250 = vld [vmem:[%s1 + $0x38] sm:$0xf]
      %v251 = vld [vmem:[%s1 + $0x3c] sm:$0xff]
      %v252 = vld [vmem:[%s1 + $0x44] sm:$0xf]
      %v253 = vld [vmem:[%s1 + $0x48] sm:$0xff]
      %v254 = vld [vmem:[%s1 + $0x50] sm:$0xf]
      %v255 = vld [vmem:[%s1 + $0x54] sm:$0xff]
      %v256 = vld [vmem:[%s1 + $0x5c] sm:$0xf]
      %v257 = vld [vmem:[%s1 + $0x60] sm:$0xff]
      %v258 = vld [vmem:[%s1 + $0x68] sm:$0xf]
      %v259 = vld [vmem:[%s1 + $0x6c] sm:$0xff]
      %v260 = vld [vmem:[%s1 + $0x74] sm:$0xf]
      %v261 = vld [vmem:[%s1 + $0x78] sm:$0x33]
      %v262 = vld [vmem:[%s1 + $0x80] sm:$0x3]
      %v268 = vunpack.c.l.b16 %v236
      %v269 = vunpack.c.l.b16 %v237
      %v270 = vunpack.c.l.b16 %v238
      %v271 = vunpack.c.l.b16 %v239
      %v272 = vunpack.c.l.b16 %v240
      %v273 = vpack.c.b16 %v269, %v268
      %v274 = vpack.c.b16 %v271, %v270
      %v275 = vpack.c.b16 %v272, %v272
      %v298 = vunpack.c.l.b16 %v241
      %v299 = vunpack.c.h.b16 %v241
      %v300 = vunpack.c.l.b16 %v242
      %v301 = vunpack.c.l.b16 %v243
      %v302 = vunpack.c.h.b16 %v243
      %v303 = vunpack.c.l.b16 %v244
      %v304 = vunpack.c.l.b16 %v245
      %v305 = vunpack.c.h.b16 %v245
      %v306 = vunpack.c.l.b16 %v246
      %v307 = vunpack.c.l.b16 %v247
      %v308 = vunpack.c.h.b16 %v247
      %v309 = vunpack.c.l.b16 %v248
      %v310 = vunpack.c.l.b16 %v249
      %v311 = vunpack.c.h.b16 %v249
      %v312 = vunpack.c.l.b16 %v250
      %v313 = vunpack.c.l.b16 %v251
      %v314 = vunpack.c.h.b16 %v251
      %v315 = vunpack.c.l.b16 %v252
      %v316 = vunpack.c.l.b16 %v253
      %v317 = vunpack.c.h.b16 %v253
      %v318 = vunpack.c.l.b16 %v254
      %v319 = vunpack.c.l.b16 %v255
      %v320 = vunpack.c.h.b16 %v255
      %v321 = vunpack.c.l.b16 %v256
      %v322 = vunpack.c.l.b16 %v257
      %v323 = vunpack.c.h.b16 %v257
      %v324 = vunpack.c.l.b16 %v258
      %v325 = vunpack.c.l.b16 %v259
      %v326 = vunpack.c.h.b16 %v259
      %v327 = vunpack.c.l.b16 %v260
      %v328 = vunpack.c.l.b16 %v261
      %v329 = vunpack.c.h.b16 %v261
      %v330 = vunpack.c.l.b16 %v262
      %v331 = vpack.c.b16 %v301, %v298
      %v332 = vpack.c.b16 %v302, %v299
      %v333 = vpack.c.b16 %v303, %v300
      %v334 = vpack.c.b16 %v307, %v304
      %v335 = vpack.c.b16 %v308, %v305
      %v336 = vpack.c.b16 %v309, %v306
      %v337 = vpack.c.b16 %v313, %v310
      %v338 = vpack.c.b16 %v314, %v311
      %v339 = vpack.c.b16 %v315, %v312
      %v340 = vpack.c.b16 %v319, %v316
      %v341 = vpack.c.b16 %v320, %v317
      %v342 = vpack.c.b16 %v321, %v318
      %v343 = vpack.c.b16 %v325, %v322
      %v344 = vpack.c.b16 %v326, %v323
      %v345 = vpack.c.b16 %v327, %v324
      %v346 = vpack.c.b16 %v328, %v328
      %v347 = vpack.c.b16 %v329, %v329
      %v348 = vpack.c.b16 %v330, %v330
      %vm364 = vcmask 687104
      %v366 = vsel %vm364, %v273, 0
      %v369 = vsel %vm364, %v274, 0
      %v372 = vsel %vm364, %v275, 0
      %vm374 = vcmask 1041408
      %v376 = vsel %vm374, %v346, 0
      %v379 = vsel %vm374, %v347, 0
      %v382 = vsel %vm374, %v348, 0
      %384 = vmatpush.bf16.msra.mxu0 0
      %385 = vmatpush.bf16.msra.mxu0 0
      %386 = vmatpush.bf16.msra.mxu0 %v376
      %387 = vmatpush.bf16.msra.mxu0 %v343
      %388 = vmatpush.bf16.msra.mxu0 %v340
      %389 = vmatpush.bf16.msra.mxu0 %v337
      %390 = vmatpush.bf16.msra.mxu0 %v334
      %391 = vmatpush.bf16.msra.mxu0 %v331
      %392 = vmatmul.bf16.gmra.mxu0 %v366
      %v393 = vpop.f32.mrf.mxu0
      %v394 = vadd.f32 0.0, %v393
      %v395 = vpop.f32.mrf.mxu0
      %v396 = vadd.f32 0.0, %v395
      %397 = vmatmul.bf16.gmra.mxu0 %v369
      %v398 = vpop.f32.mrf.mxu0
      %v399 = vadd.f32 0.0, %v398
      %v400 = vpop.f32.mrf.mxu0
      %v401 = vadd.f32 0.0, %v400
      %402 = vmatmul.bf16.gmra.mxu0 %v372
      %v403 = vpop.f32.mrf.mxu0
      %v404 = vadd.f32 0.0, %v403
      %v405 = vpop.f32.mrf.mxu0
      %406 = vdwg.mxu0
      %407 = vmatpush.bf16.msra.mxu0 0
      %408 = vmatpush.bf16.msra.mxu0 0
      %409 = vmatpush.bf16.msra.mxu0 %v379
      %410 = vmatpush.bf16.msra.mxu0 %v344
      %411 = vmatpush.bf16.msra.mxu0 %v341
      %412 = vmatpush.bf16.msra.mxu0 %v338
      %413 = vmatpush.bf16.msra.mxu0 %v335
      %414 = vmatpush.bf16.msra.mxu0 %v332
      %415 = vmatmul.bf16.gmra.mxu0 %v366
      %v416 = vpop.f32.mrf.mxu0
      %v417 = vadd.f32 0.0, %v416
      %v418 = vpop.f32.mrf.mxu0
      %v419 = vadd.f32 0.0, %v418
      %420 = vmatmul.bf16.gmra.mxu0 %v369
      %v421 = vpop.f32.mrf.mxu0
      %v422 = vadd.f32 0.0, %v421
      %v423 = vpop.f32.mrf.mxu0
      %v424 = vadd.f32 0.0, %v423
      %425 = vmatmul.bf16.gmra.mxu0 %v372
      %v426 = vpop.f32.mrf.mxu0
      %v427 = vadd.f32 0.0, %v426
      %v428 = vpop.f32.mrf.mxu0
      %429 = vdwg.mxu0
      %430 = vmatpush.bf16.msra.mxu0 0
      %431 = vmatpush.bf16.msra.mxu0 0
      %432 = vmatpush.bf16.msra.mxu0 %v382
      %433 = vmatpush.bf16.msra.mxu0 %v345
      %434 = vmatpush.bf16.msra.mxu0 %v342
      %435 = vmatpush.bf16.msra.mxu0 %v339
      %436 = vmatpush.bf16.msra.mxu0 %v336
      %437 = vmatpush.bf16.msra.mxu0 %v333
      %438 = vmatmul.bf16.gmra.mxu0 %v366
      %v439 = vpop.f32.mrf.mxu0
      %v440 = vadd.f32 0.0, %v439
      %v441 = vpop.f32.mrf.mxu0
      %v442 = vadd.f32 0.0, %v441
      %443 = vmatmul.bf16.gmra.mxu0 %v369
      %v444 = vpop.f32.mrf.mxu0
      %v445 = vadd.f32 0.0, %v444
      %v446 = vpop.f32.mrf.mxu0
      %v447 = vadd.f32 0.0, %v446
      %448 = vmatmul.bf16.gmra.mxu0 %v372
      %v449 = vpop.f32.mrf.mxu0
      %v450 = vadd.f32 0.0, %v449
      %v451 = vpop.f32.mrf.mxu0
      %452 = vdwg.mxu0
      %v453 = vmul.f32 %v394, 0.1
      %v454 = vmul.f32 %v417, 0.1
      %v455 = vmul.f32 %v440, 0.1
      %v456 = vmul.f32 %v396, 0.1
      %v457 = vmul.f32 %v419, 0.1
      %v458 = vmul.f32 %v442, 0.1
      %v459 = vmul.f32 %v399, 0.1
      %v460 = vmul.f32 %v422, 0.1
      %v461 = vmul.f32 %v445, 0.1
      %v462 = vmul.f32 %v401, 0.1
      %v463 = vmul.f32 %v424, 0.1
      %v464 = vmul.f32 %v447, 0.1
      %v465 = vmul.f32 %v404, 0.1
      %v466 = vmul.f32 %v427, 0.1
      %v467 = vmul.f32 %v450, 0.1
      %v468 = vmax.f32 %v394, %v453
      %v469 = vmax.f32 %v417, %v454
      %v470 = vmax.f32 %v440, %v455
      %v471 = vmax.f32 %v396, %v456
      %v472 = vmax.f32 %v419, %v457
      %v473 = vmax.f32 %v442, %v458
      %v474 = vmax.f32 %v399, %v459
      %v475 = vmax.f32 %v422, %v460
      %v476 = vmax.f32 %v445, %v461
      %v477 = vmax.f32 %v401, %v462
      %v478 = vmax.f32 %v424, %v463
      %v479 = vmax.f32 %v447, %v464
      %v480 = vmax.f32 %v404, %v465
      %v481 = vmax.f32 %v427, %v466
      %v482 = vmax.f32 %v450, %v467
      %v483 = vpack.c.bf16 %v469, %v468
      %v484 = vpack.c.bf16 %v470, %v470
      %v485 = vpack.c.bf16 %v472, %v471
      %v486 = vpack.c.bf16 %v473, %v473
      %v487 = vpack.c.bf16 %v475, %v474
      %v488 = vpack.c.bf16 %v476, %v476
      %v489 = vpack.c.bf16 %v478, %v477
      %v490 = vpack.c.bf16 %v479, %v479
      %v491 = vpack.c.bf16 %v481, %v480
      %v492 = vpack.c.bf16 %v482, %v482
      %493 = vst [vmem:[#allocation2] sm:$0xff] %v483
      %494 = vst [vmem:[#allocation2 + $0x8] sm:$0xf] %v484
      %495 = vst [vmem:[#allocation2 + $0xc] sm:$0xff] %v485
      %496 = vst [vmem:[#allocation2 + $0x14] sm:$0xf] %v486
      %497 = vst [vmem:[#allocation2 + $0x18] sm:$0xff] %v487
      %498 = vst [vmem:[#allocation2 + $0x20] sm:$0xf] %v488
      %499 = vst [vmem:[#allocation2 + $0x24] sm:$0xff] %v489
      %500 = vst [vmem:[#allocation2 + $0x2c] sm:$0xf] %v490
      %501 = vst [vmem:[#allocation2 + $0x30] sm:$0x33] %v491
      %502 = vst [vmem:[#allocation2 + $0x38] sm:$0x3] %v492
      %v503 = vld [vmem:[#allocation2] sm:$0xff]
      %v504 = vld [vmem:[#allocation2 + $0x8] sm:$0xf]
      %v505 = vld [vmem:[#allocation2 + $0xc] sm:$0xff]
      %v506 = vld [vmem:[#allocation2 + $0x14] sm:$0xf]
      %v507 = vld [vmem:[%s2] sm:$0xf]
      %v508 = vld [vmem:[%s2 + $0x4] sm:$0xf]
      %v509 = vld [vmem:[%s2 + $0x8] sm:$0xf]
      %v510 = vld [vmem:[%s2 + $0xc] sm:$0xf]
      %v511 = vld [vmem:[%s2 + $0x10] sm:$0xf]
      %v512 = vld [vmem:[%s2 + $0x14] sm:$0xf]
      %v513 = vld [vmem:[%s2 + $0x18] sm:$0xf]
      %v514 = vld [vmem:[%s2 + $0x1c] sm:$0xf]
      %v515 = vld [vmem:[%s2 + $0x20] sm:$0xf]
      %v516 = vld [vmem:[%s2 + $0x24] sm:$0xf]
      %v517 = vld [vmem:[%s2 + $0x28] sm:$0xf]
      %v518 = vld [vmem:[%s2 + $0x2c] sm:$0xf]
      %v519 = vld [vmem:[%s2 + $0x30] sm:$0xf]
      %v520 = vld [vmem:[%s2 + $0x34] sm:$0xf]
      %v521 = vld [vmem:[%s2 + $0x38] sm:$0xf]
      %v522 = vld [vmem:[%s2 + $0x3c] sm:$0xf]
      %v523 = vld [vmem:[%s2 + $0x40] sm:$0xf]
      %v524 = vld [vmem:[%s2 + $0x44] sm:$0xf]
      %v525 = vld [vmem:[%s2 + $0x48] sm:$0xf]
      %v526 = vld [vmem:[%s2 + $0x4c] sm:$0xf]
      %v527 = vld [vmem:[%s2 + $0x50] sm:$0xf]
      %v528 = vld [vmem:[%s2 + $0x54] sm:$0xf]
      %v529 = vld [vmem:[%s2 + $0x58] sm:$0xf]
      %v530 = vld [vmem:[%s2 + $0x5c] sm:$0xf]
      %v531 = vld [vmem:[%s2 + $0x60] sm:$0xf]
      %v532 = vld [vmem:[%s2 + $0x64] sm:$0xf]
      %v533 = vld [vmem:[%s2 + $0x68] sm:$0xf]
      %v534 = vld [vmem:[%s2 + $0x6c] sm:$0xf]
      %v535 = vld [vmem:[%s2 + $0x70] sm:$0xf]
      %v536 = vld [vmem:[%s2 + $0x74] sm:$0xf]
      %v537 = vld [vmem:[%s2 + $0x78] sm:$0xf]
      %v538 = vld [vmem:[%s2 + $0x7c] sm:$0xf]
      %v539 = vld [vmem:[%s2 + $0x80] sm:$0xf]
      %v540 = vld [vmem:[%s2 + $0x84] sm:$0xf]
      %v541 = vld [vmem:[%s2 + $0x88] sm:$0xf]
      %v542 = vld [vmem:[%s2 + $0x8c] sm:$0xf]
      %v543 = vld [vmem:[%s2 + $0x90] sm:$0xf]
      %v544 = vld [vmem:[%s2 + $0x94] sm:$0xf]
      %v545 = vld [vmem:[%s2 + $0x98] sm:$0xf]
      %v546 = vld [vmem:[%s2 + $0x9c] sm:$0xf]
      %v547 = vld [vmem:[%s2 + $0xa0] sm:$0xf]
      %v548 = vld [vmem:[%s2 + $0xa4] sm:$0xf]
      %v549 = vld [vmem:[%s2 + $0xa8] sm:$0xf]
      %v550 = vld [vmem:[%s2 + $0xac] sm:$0xf]
      %v551 = vld [vmem:[%s2 + $0xb0] sm:$0xf]
      %v552 = vld [vmem:[%s2 + $0xb4] sm:$0xf]
      %v553 = vld [vmem:[%s2 + $0xb8] sm:$0xf]
      %v554 = vld [vmem:[%s2 + $0xbc] sm:$0xf]
      %v559 = vunpack.c.l.b16 %v503
      %v560 = vunpack.c.h.b16 %v503
      %v561 = vunpack.c.l.b16 %v504
      %v562 = vunpack.c.l.b16 %v505
      %v563 = vunpack.c.h.b16 %v505
      %v564 = vunpack.c.l.b16 %v506
      %v565 = vpack.c.b16 %v562, %v559
      %v566 = vpack.c.b16 %v563, %v560
      %v567 = vpack.c.b16 %v564, %v561
      %v619 = vunpack.c.l.b16 %v507
      %v620 = vunpack.c.l.b16 %v508
      %v621 = vunpack.c.l.b16 %v509
      %v622 = vunpack.c.l.b16 %v510
      %v623 = vunpack.c.l.b16 %v511
      %v624 = vunpack.c.l.b16 %v512
      %v625 = vunpack.c.l.b16 %v513
      %v626 = vunpack.c.l.b16 %v514
      %v627 = vunpack.c.l.b16 %v515
      %v628 = vunpack.c.l.b16 %v516
      %v629 = vunpack.c.l.b16 %v517
      %v630 = vunpack.c.l.b16 %v518
      %v631 = vunpack.c.l.b16 %v519
      %v632 = vunpack.c.l.b16 %v520
      %v633 = vunpack.c.l.b16 %v521
      %v634 = vunpack.c.l.b16 %v522
      %v635 = vunpack.c.l.b16 %v523
      %v636 = vunpack.c.l.b16 %v524
      %v637 = vunpack.c.l.b16 %v525
      %v638 = vunpack.c.l.b16 %v526
      %v639 = vunpack.c.l.b16 %v527
      %v640 = vunpack.c.l.b16 %v528
      %v641 = vunpack.c.l.b16 %v529
      %v642 = vunpack.c.l.b16 %v530
      %v643 = vunpack.c.l.b16 %v531
      %v644 = vunpack.c.l.b16 %v532
      %v645 = vunpack.c.l.b16 %v533
      %v646 = vunpack.c.l.b16 %v534
      %v647 = vunpack.c.l.b16 %v535
      %v648 = vunpack.c.l.b16 %v536
      %v649 = vunpack.c.l.b16 %v537
      %v650 = vunpack.c.l.b16 %v538
      %v651 = vunpack.c.l.b16 %v539
      %v652 = vunpack.c.l.b16 %v540
      %v653 = vunpack.c.l.b16 %v541
      %v654 = vunpack.c.l.b16 %v542
      %v655 = vunpack.c.l.b16 %v543
      %v656 = vunpack.c.l.b16 %v544
      %v657 = vunpack.c.l.b16 %v545
      %v658 = vunpack.c.l.b16 %v546
      %v659 = vunpack.c.l.b16 %v547
      %v660 = vunpack.c.l.b16 %v548
      %v661 = vunpack.c.l.b16 %v549
      %v662 = vunpack.c.l.b16 %v550
      %v663 = vunpack.c.l.b16 %v551
      %v664 = vunpack.c.l.b16 %v552
      %v665 = vunpack.c.l.b16 %v553
      %v666 = vunpack.c.l.b16 %v554
      %v667 = vpack.c.b16 %v620, %v619
      %v668 = vpack.c.b16 %v622, %v621
      %v669 = vpack.c.b16 %v624, %v623
      %v670 = vpack.c.b16 %v626, %v625
      %v671 = vpack.c.b16 %v628, %v627
      %v672 = vpack.c.b16 %v630, %v629
      %v673 = vpack.c.b16 %v632, %v631
      %v674 = vpack.c.b16 %v634, %v633
      %v675 = vpack.c.b16 %v636, %v635
      %v676 = vpack.c.b16 %v638, %v637
      %v677 = vpack.c.b16 %v640, %v639
      %v678 = vpack.c.b16 %v642, %v641
      %v679 = vpack.c.b16 %v644, %v643
      %v680 = vpack.c.b16 %v646, %v645
      %v681 = vpack.c.b16 %v648, %v647
      %v682 = vpack.c.b16 %v650, %v649
      %v683 = vpack.c.b16 %v652, %v651
      %v684 = vpack.c.b16 %v654, %v653
      %v685 = vpack.c.b16 %v656, %v655
      %v686 = vpack.c.b16 %v658, %v657
      %v687 = vpack.c.b16 %v660, %v659
      %v688 = vpack.c.b16 %v662, %v661
      %v689 = vpack.c.b16 %v664, %v663
      %v690 = vpack.c.b16 %v666, %v665
      %715 = vmatpush.bf16.msra.mxu0 %v674
      %716 = vmatpush.bf16.msra.mxu0 %v673
      %717 = vmatpush.bf16.msra.mxu0 %v672
      %718 = vmatpush.bf16.msra.mxu0 %v671
      %719 = vmatpush.bf16.msra.mxu0 %v670
      %720 = vmatpush.bf16.msra.mxu0 %v669
      %721 = vmatpush.bf16.msra.mxu0 %v668
      %722 = vmatpush.bf16.msra.mxu0 %v667
      %723 = vmatmul.bf16.gmra.mxu0 %v565
      %v724 = vpop.f32.mrf.mxu0
      %v725 = vadd.f32 0.0, %v724
      %v726 = vpop.f32.mrf.mxu0
      %v727 = vadd.f32 0.0, %v726
      %728 = vdwg.mxu0
      %729 = vmatpush.bf16.msra.mxu0 %v682
      %730 = vmatpush.bf16.msra.mxu0 %v681
      %731 = vmatpush.bf16.msra.mxu0 %v680
      %732 = vmatpush.bf16.msra.mxu0 %v679
      %733 = vmatpush.bf16.msra.mxu0 %v678
      %734 = vmatpush.bf16.msra.mxu0 %v677
      %735 = vmatpush.bf16.msra.mxu0 %v676
      %736 = vmatpush.bf16.msra.mxu0 %v675
      %737 = vmatmul.bf16.gmra.mxu0 %v566
      %v738 = vpop.f32.mrf.mxu0
      %v739 = vadd.f32 %v725, %v738
      %v740 = vpop.f32.mrf.mxu0
      %v741 = vadd.f32 %v727, %v740
      %742 = vdwg.mxu0
      %743 = vmatpush.bf16.msra.mxu0 %v690
      %744 = vmatpush.bf16.msra.mxu0 %v689
      %745 = vmatpush.bf16.msra.mxu0 %v688
      %746 = vmatpush.bf16.msra.mxu0 %v687
      %747 = vmatpush.bf16.msra.mxu0 %v686
      %748 = vmatpush.bf16.msra.mxu0 %v685
      %749 = vmatpush.bf16.msra.mxu0 %v684
      %750 = vmatpush.bf16.msra.mxu0 %v683
      %751 = vmatmul.bf16.gmra.mxu0 %v567
      %v752 = vpop.f32.mrf.mxu0
      %v753 = vadd.f32 %v739, %v752
      %v754 = vpop.f32.mrf.mxu0
      %v755 = vadd.f32 %v741, %v754
      %756 = vdwg.mxu0
      %757 = vst [vmem:[#allocation3] sm:$0xff] %v753
      %758 = vst [vmem:[#allocation3 + $0x8] sm:$0xff] %v755
      %v759 = vld [vmem:[#allocation3] sm:$0xff]
      %v760 = vld [vmem:[#allocation3 + $0x8] sm:$0xff]
      %v761 = vld [vmem:[#allocation2 + $0x18] sm:$0xcc]
      %v762 = vld [vmem:[#allocation2 + $0x20] sm:$0xc]
      %v763 = vld [vmem:[#allocation2 + $0x24] sm:$0xff]
      %v764 = vld [vmem:[#allocation2 + $0x2c] sm:$0xf]
      %v765 = vld [vmem:[#allocation2 + $0x30] sm:$0x33]
      %v766 = vld [vmem:[#allocation2 + $0x38] sm:$0x3]
      %s767 = scalar_lea.vmem %s2, 192
      %v768 = vld [vmem:[%s767] sm:$0xf]
      %v769 = vld [vmem:[%s767 + $0x4] sm:$0xf]
      %v770 = vld [vmem:[%s767 + $0x8] sm:$0xf]
      %v771 = vld [vmem:[%s767 + $0xc] sm:$0xf]
      %v772 = vld [vmem:[%s767 + $0x10] sm:$0xf]
      %v773 = vld [vmem:[%s767 + $0x14] sm:$0xf]
      %v774 = vld [vmem:[%s767 + $0x18] sm:$0xf]
      %v775 = vld [vmem:[%s767 + $0x1c] sm:$0xf]
      %v776 = vld [vmem:[%s767 + $0x20] sm:$0xf]
      %v777 = vld [vmem:[%s767 + $0x24] sm:$0xf]
      %v778 = vld [vmem:[%s767 + $0x28] sm:$0xf]
      %v779 = vld [vmem:[%s767 + $0x2c] sm:$0xf]
      %v780 = vld [vmem:[%s767 + $0x30] sm:$0xf]
      %v781 = vld [vmem:[%s767 + $0x34] sm:$0xf]
      %v782 = vld [vmem:[%s767 + $0x38] sm:$0xf]
      %v783 = vld [vmem:[%s767 + $0x3c] sm:$0xf]
      %v784 = vld [vmem:[%s767 + $0x40] sm:$0xf]
      %v785 = vld [vmem:[%s767 + $0x44] sm:$0xf]
      %v786 = vld [vmem:[%s767 + $0x48] sm:$0xf]
      %v787 = vld [vmem:[%s767 + $0x4c] sm:$0xf]
      %v788 = vld [vmem:[%s767 + $0x50] sm:$0xf]
      %v789 = vld [vmem:[%s767 + $0x54] sm:$0xf]
      %v790 = vld [vmem:[%s767 + $0x58] sm:$0xf]
      %v791 = vld [vmem:[%s767 + $0x5c] sm:$0xf]
      %v792 = vld [vmem:[%s767 + $0x60] sm:$0xf]
      %v793 = vld [vmem:[%s767 + $0x64] sm:$0xf]
      %v794 = vld [vmem:[%s767 + $0x68] sm:$0xf]
      %v795 = vld [vmem:[%s767 + $0x6c] sm:$0xf]
      %v796 = vld [vmem:[%s767 + $0x70] sm:$0xf]
      %v797 = vld [vmem:[%s767 + $0x74] sm:$0xf]
      %v798 = vld [vmem:[%s767 + $0x78] sm:$0xf]
      %v799 = vld [vmem:[%s767 + $0x7c] sm:$0xf]
      %v800 = vld [vmem:[%s767 + $0x80] sm:$0xf]
      %v801 = vld [vmem:[%s767 + $0x84] sm:$0xf]
      %v802 = vld [vmem:[%s767 + $0x88] sm:$0xf]
      %v803 = vld [vmem:[%s767 + $0x8c] sm:$0xf]
      %v804 = vld [vmem:[%s767 + $0x90] sm:$0xf]
      %v805 = vld [vmem:[%s767 + $0x94] sm:$0xf]
      %v806 = vld [vmem:[%s767 + $0x98] sm:$0xf]
      %v807 = vld [vmem:[%s767 + $0x9c] sm:$0xf]
      %v808 = vld [vmem:[%s767 + $0xa0] sm:$0xf]
      %v809 = vld [vmem:[%s767 + $0xa4] sm:$0xf]
      %v810 = vld [vmem:[%s767 + $0xa8] sm:$0xf]
      %v811 = vld [vmem:[%s767 + $0xac] sm:$0xf]
      %v812 = vld [vmem:[%s767 + $0xb0] sm:$0xf]
      %v813 = vld [vmem:[%s767 + $0xb4] sm:$0xf]
      %v814 = vld [vmem:[%s767 + $0xb8] sm:$0xf]
      %v815 = vld [vmem:[%s767 + $0xbc] sm:$0xf]
      %v822 = vunpack.c.l.b16 %v761
      %v823 = vunpack.c.h.b16 %v761
      %v824 = vunpack.c.l.b16 %v762
      %v825 = vunpack.c.l.b16 %v763
      %v826 = vunpack.c.h.b16 %v763
      %v827 = vunpack.c.l.b16 %v764
      %v828 = vunpack.c.l.b16 %v765
      %v829 = vunpack.c.h.b16 %v765
      %v830 = vunpack.c.l.b16 %v766
      %v831 = vpack.c.b16 %v825, %v822
      %v832 = vpack.c.b16 %v826, %v823
      %v833 = vpack.c.b16 %v827, %v824
      %v834 = vpack.c.b16 %v828, %v828
      %v835 = vpack.c.b16 %v829, %v829
      %v836 = vpack.c.b16 %v830, %v830
      %vm837 = vcmask 1045504
      %v838 = vrot.slane %v831, 2
      %v839 = vrot.slane %v834, 2
      %v840 = vsel %vm837, %v838, %v839
      %v841 = vrot.slane %v832, 2
      %v842 = vrot.slane %v835, 2
      %v843 = vsel %vm837, %v841, %v842
      %v844 = vrot.slane %v833, 2
      %v845 = vrot.slane %v836, 2
      %v846 = vsel %vm837, %v844, %v845
      %v898 = vunpack.c.l.b16 %v768
      %v899 = vunpack.c.l.b16 %v769
      %v900 = vunpack.c.l.b16 %v770
      %v901 = vunpack.c.l.b16 %v771
      %v902 = vunpack.c.l.b16 %v772
      %v903 = vunpack.c.l.b16 %v773
      %v904 = vunpack.c.l.b16 %v774
      %v905 = vunpack.c.l.b16 %v775
      %v906 = vunpack.c.l.b16 %v776
      %v907 = vunpack.c.l.b16 %v777
      %v908 = vunpack.c.l.b16 %v778
      %v909 = vunpack.c.l.b16 %v779
      %v910 = vunpack.c.l.b16 %v780
      %v911 = vunpack.c.l.b16 %v781
      %v912 = vunpack.c.l.b16 %v782
      %v913 = vunpack.c.l.b16 %v783
      %v914 = vunpack.c.l.b16 %v784
      %v915 = vunpack.c.l.b16 %v785
      %v916 = vunpack.c.l.b16 %v786
      %v917 = vunpack.c.l.b16 %v787
      %v918 = vunpack.c.l.b16 %v788
      %v919 = vunpack.c.l.b16 %v789
      %v920 = vunpack.c.l.b16 %v790
      %v921 = vunpack.c.l.b16 %v791
      %v922 = vunpack.c.l.b16 %v792
      %v923 = vunpack.c.l.b16 %v793
      %v924 = vunpack.c.l.b16 %v794
      %v925 = vunpack.c.l.b16 %v795
      %v926 = vunpack.c.l.b16 %v796
      %v927 = vunpack.c.l.b16 %v797
      %v928 = vunpack.c.l.b16 %v798
      %v929 = vunpack.c.l.b16 %v799
      %v930 = vunpack.c.l.b16 %v800
      %v931 = vunpack.c.l.b16 %v801
      %v932 = vunpack.c.l.b16 %v802
      %v933 = vunpack.c.l.b16 %v803
      %v934 = vunpack.c.l.b16 %v804
      %v935 = vunpack.c.l.b16 %v805
      %v936 = vunpack.c.l.b16 %v806
      %v937 = vunpack.c.l.b16 %v807
      %v938 = vunpack.c.l.b16 %v808
      %v939 = vunpack.c.l.b16 %v809
      %v940 = vunpack.c.l.b16 %v810
      %v941 = vunpack.c.l.b16 %v811
      %v942 = vunpack.c.l.b16 %v812
      %v943 = vunpack.c.l.b16 %v813
      %v944 = vunpack.c.l.b16 %v814
      %v945 = vunpack.c.l.b16 %v815
      %v946 = vpack.c.b16 %v899, %v898
      %v947 = vpack.c.b16 %v901, %v900
      %v948 = vpack.c.b16 %v903, %v902
      %v949 = vpack.c.b16 %v905, %v904
      %v950 = vpack.c.b16 %v907, %v906
      %v951 = vpack.c.b16 %v909, %v908
      %v952 = vpack.c.b16 %v911, %v910
      %v953 = vpack.c.b16 %v913, %v912
      %v954 = vpack.c.b16 %v915, %v914
      %v955 = vpack.c.b16 %v917, %v916
      %v956 = vpack.c.b16 %v919, %v918
      %v957 = vpack.c.b16 %v921, %v920
      %v958 = vpack.c.b16 %v923, %v922
      %v959 = vpack.c.b16 %v925, %v924
      %v960 = vpack.c.b16 %v927, %v926
      %v961 = vpack.c.b16 %v929, %v928
      %v962 = vpack.c.b16 %v931, %v930
      %v963 = vpack.c.b16 %v933, %v932
      %v964 = vpack.c.b16 %v935, %v934
      %v965 = vpack.c.b16 %v937, %v936
      %v966 = vpack.c.b16 %v939, %v938
      %v967 = vpack.c.b16 %v941, %v940
      %v968 = vpack.c.b16 %v943, %v942
      %v969 = vpack.c.b16 %v945, %v944
      %994 = vmatpush.bf16.msra.mxu0 %v953
      %995 = vmatpush.bf16.msra.mxu0 %v952
      %996 = vmatpush.bf16.msra.mxu0 %v951
      %997 = vmatpush.bf16.msra.mxu0 %v950
      %998 = vmatpush.bf16.msra.mxu0 %v949
      %999 = vmatpush.bf16.msra.mxu0 %v948
      %1000 = vmatpush.bf16.msra.mxu0 %v947
      %1001 = vmatpush.bf16.msra.mxu0 %v946
      %1002 = vmatmul.bf16.gmra.mxu0 %v840
      %v1003 = vpop.f32.mrf.mxu0
      %v1004 = vadd.f32 0.0, %v1003
      %v1005 = vpop.f32.mrf.mxu0
      %v1006 = vadd.f32 0.0, %v1005
      %1007 = vdwg.mxu0
      %1008 = vmatpush.bf16.msra.mxu0 %v961
      %1009 = vmatpush.bf16.msra.mxu0 %v960
      %1010 = vmatpush.bf16.msra.mxu0 %v959
      %1011 = vmatpush.bf16.msra.mxu0 %v958
      %1012 = vmatpush.bf16.msra.mxu0 %v957
      %1013 = vmatpush.bf16.msra.mxu0 %v956
      %1014 = vmatpush.bf16.msra.mxu0 %v955
      %1015 = vmatpush.bf16.msra.mxu0 %v954
      %1016 = vmatmul.bf16.gmra.mxu0 %v843
      %v1017 = vpop.f32.mrf.mxu0
      %v1018 = vadd.f32 %v1004, %v1017
      %v1019 = vpop.f32.mrf.mxu0
      %v1020 = vadd.f32 %v1006, %v1019
      %1021 = vdwg.mxu0
      %1022 = vmatpush.bf16.msra.mxu0 %v969
      %1023 = vmatpush.bf16.msra.mxu0 %v968
      %1024 = vmatpush.bf16.msra.mxu0 %v967
      %1025 = vmatpush.bf16.msra.mxu0 %v966
      %1026 = vmatpush.bf16.msra.mxu0 %v965
      %1027 = vmatpush.bf16.msra.mxu0 %v964
      %1028 = vmatpush.bf16.msra.mxu0 %v963
      %1029 = vmatpush.bf16.msra.mxu0 %v962
      %1030 = vmatmul.bf16.gmra.mxu0 %v846
      %v1031 = vpop.f32.mrf.mxu0
      %v1032 = vadd.f32 %v1018, %v1031
      %v1033 = vpop.f32.mrf.mxu0
      %v1034 = vadd.f32 %v1020, %v1033
      %1035 = vdwg.mxu0
      %v1036 = vadd.f32 %v759, %v1032
      %v1037 = vadd.f32 %v760, %v1034
      %1038 = vst [vmem:[#allocation3] sm:$0xff] %v1036
      %1039 = vst [vmem:[#allocation3 + $0x8] sm:$0xff] %v1037
      %v1040 = vld [vmem:[#allocation3] sm:$0xff]
      %v1041 = vld [vmem:[#allocation3 + $0x8] sm:$0xff]
      %v1042 = vld [vmem:[#allocation2] sm:$0xcc]
      %v1043 = vld [vmem:[#allocation2 + $0x8] sm:$0xc]
      %v1044 = vld [vmem:[#allocation2 + $0xc] sm:$0xff]
      %v1045 = vld [vmem:[#allocation2 + $0x14] sm:$0xf]
      %v1046 = vld [vmem:[#allocation2 + $0x18] sm:$0x33]
      %v1047 = vld [vmem:[#allocation2 + $0x20] sm:$0x3]
      %s1048 = scalar_lea.vmem %s2, 384
      %v1049 = vld [vmem:[%s1048] sm:$0xf]
      %v1050 = vld [vmem:[%s1048 + $0x4] sm:$0xf]
      %v1051 = vld [vmem:[%s1048 + $0x8] sm:$0xf]
      %v1052 = vld [vmem:[%s1048 + $0xc] sm:$0xf]
      %v1053 = vld [vmem:[%s1048 + $0x10] sm:$0xf]
      %v1054 = vld [vmem:[%s1048 + $0x14] sm:$0xf]
      %v1055 = vld [vmem:[%s1048 + $0x18] sm:$0xf]
      %v1056 = vld [vmem:[%s1048 + $0x1c] sm:$0xf]
      %v1057 = vld [vmem:[%s1048 + $0x20] sm:$0xf]
      %v1058 = vld [vmem:[%s1048 + $0x24] sm:$0xf]
      %v1059 = vld [vmem:[%s1048 + $0x28] sm:$0xf]
      %v1060 = vld [vmem:[%s1048 + $0x2c] sm:$0xf]
      %v1061 = vld [vmem:[%s1048 + $0x30] sm:$0xf]
      %v1062 = vld [vmem:[%s1048 + $0x34] sm:$0xf]
      %v1063 = vld [vmem:[%s1048 + $0x38] sm:$0xf]
      %v1064 = vld [vmem:[%s1048 + $0x3c] sm:$0xf]
      %v1065 = vld [vmem:[%s1048 + $0x40] sm:$0xf]
      %v1066 = vld [vmem:[%s1048 + $0x44] sm:$0xf]
      %v1067 = vld [vmem:[%s1048 + $0x48] sm:$0xf]
      %v1068 = vld [vmem:[%s1048 + $0x4c] sm:$0xf]
      %v1069 = vld [vmem:[%s1048 + $0x50] sm:$0xf]
      %v1070 = vld [vmem:[%s1048 + $0x54] sm:$0xf]
      %v1071 = vld [vmem:[%s1048 + $0x58] sm:$0xf]
      %v1072 = vld [vmem:[%s1048 + $0x5c] sm:$0xf]
      %v1073 = vld [vmem:[%s1048 + $0x60] sm:$0xf]
      %v1074 = vld [vmem:[%s1048 + $0x64] sm:$0xf]
      %v1075 = vld [vmem:[%s1048 + $0x68] sm:$0xf]
      %v1076 = vld [vmem:[%s1048 + $0x6c] sm:$0xf]
      %v1077 = vld [vmem:[%s1048 + $0x70] sm:$0xf]
      %v1078 = vld [vmem:[%s1048 + $0x74] sm:$0xf]
      %v1079 = vld [vmem:[%s1048 + $0x78] sm:$0xf]
      %v1080 = vld [vmem:[%s1048 + $0x7c] sm:$0xf]
      %v1081 = vld [vmem:[%s1048 + $0x80] sm:$0xf]
      %v1082 = vld [vmem:[%s1048 + $0x84] sm:$0xf]
      %v1083 = vld [vmem:[%s1048 + $0x88] sm:$0xf]
      %v1084 = vld [vmem:[%s1048 + $0x8c] sm:$0xf]
      %v1085 = vld [vmem:[%s1048 + $0x90] sm:$0xf]
      %v1086 = vld [vmem:[%s1048 + $0x94] sm:$0xf]
      %v1087 = vld [vmem:[%s1048 + $0x98] sm:$0xf]
      %v1088 = vld [vmem:[%s1048 + $0x9c] sm:$0xf]
      %v1089 = vld [vmem:[%s1048 + $0xa0] sm:$0xf]
      %v1090 = vld [vmem:[%s1048 + $0xa4] sm:$0xf]
      %v1091 = vld [vmem:[%s1048 + $0xa8] sm:$0xf]
      %v1092 = vld [vmem:[%s1048 + $0xac] sm:$0xf]
      %v1093 = vld [vmem:[%s1048 + $0xb0] sm:$0xf]
      %v1094 = vld [vmem:[%s1048 + $0xb4] sm:$0xf]
      %v1095 = vld [vmem:[%s1048 + $0xb8] sm:$0xf]
      %v1096 = vld [vmem:[%s1048 + $0xbc] sm:$0xf]
      %v1103 = vunpack.c.l.b16 %v1042
      %v1104 = vunpack.c.h.b16 %v1042
      %v1105 = vunpack.c.l.b16 %v1043
      %v1106 = vunpack.c.l.b16 %v1044
      %v1107 = vunpack.c.h.b16 %v1044
      %v1108 = vunpack.c.l.b16 %v1045
      %v1109 = vunpack.c.l.b16 %v1046
      %v1110 = vunpack.c.h.b16 %v1046
      %v1111 = vunpack.c.l.b16 %v1047
      %v1112 = vpack.c.b16 %v1106, %v1103
      %v1113 = vpack.c.b16 %v1107, %v1104
      %v1114 = vpack.c.b16 %v1108, %v1105
      %v1115 = vpack.c.b16 %v1109, %v1109
      %v1116 = vpack.c.b16 %v1110, %v1110
      %v1117 = vpack.c.b16 %v1111, %v1111
      %v1118 = vrot.slane %v1112, 2
      %v1119 = vrot.slane %v1115, 2
      %v1120 = vsel %vm837, %v1118, %v1119
      %v1121 = vrot.slane %v1113, 2
      %v1122 = vrot.slane %v1116, 2
      %v1123 = vsel %vm837, %v1121, %v1122
      %v1124 = vrot.slane %v1114, 2
      %v1125 = vrot.slane %v1117, 2
      %v1126 = vsel %vm837, %v1124, %v1125
      %v1178 = vunpack.c.l.b16 %v1049
      %v1179 = vunpack.c.l.b16 %v1050
      %v1180 = vunpack.c.l.b16 %v1051
      %v1181 = vunpack.c.l.b16 %v1052
      %v1182 = vunpack.c.l.b16 %v1053
      %v1183 = vunpack.c.l.b16 %v1054
      %v1184 = vunpack.c.l.b16 %v1055
      %v1185 = vunpack.c.l.b16 %v1056
      %v1186 = vunpack.c.l.b16 %v1057
      %v1187 = vunpack.c.l.b16 %v1058
      %v1188 = vunpack.c.l.b16 %v1059
      %v1189 = vunpack.c.l.b16 %v1060
      %v1190 = vunpack.c.l.b16 %v1061
      %v1191 = vunpack.c.l.b16 %v1062
      %v1192 = vunpack.c.l.b16 %v1063
      %v1193 = vunpack.c.l.b16 %v1064
      %v1194 = vunpack.c.l.b16 %v1065
      %v1195 = vunpack.c.l.b16 %v1066
      %v1196 = vunpack.c.l.b16 %v1067
      %v1197 = vunpack.c.l.b16 %v1068
      %v1198 = vunpack.c.l.b16 %v1069
      %v1199 = vunpack.c.l.b16 %v1070
      %v1200 = vunpack.c.l.b16 %v1071
      %v1201 = vunpack.c.l.b16 %v1072
      %v1202 = vunpack.c.l.b16 %v1073
      %v1203 = vunpack.c.l.b16 %v1074
      %v1204 = vunpack.c.l.b16 %v1075
      %v1205 = vunpack.c.l.b16 %v1076
      %v1206 = vunpack.c.l.b16 %v1077
      %v1207 = vunpack.c.l.b16 %v1078
      %v1208 = vunpack.c.l.b16 %v1079
      %v1209 = vunpack.c.l.b16 %v1080
      %v1210 = vunpack.c.l.b16 %v1081
      %v1211 = vunpack.c.l.b16 %v1082
      %v1212 = vunpack.c.l.b16 %v1083
      %v1213 = vunpack.c.l.b16 %v1084
      %v1214 = vunpack.c.l.b16 %v1085
      %v1215 = vunpack.c.l.b16 %v1086
      %v1216 = vunpack.c.l.b16 %v1087
      %v1217 = vunpack.c.l.b16 %v1088
      %v1218 = vunpack.c.l.b16 %v1089
      %v1219 = vunpack.c.l.b16 %v1090
      %v1220 = vunpack.c.l.b16 %v1091
      %v1221 = vunpack.c.l.b16 %v1092
      %v1222 = vunpack.c.l.b16 %v1093
      %v1223 = vunpack.c.l.b16 %v1094
      %v1224 = vunpack.c.l.b16 %v1095
      %v1225 = vunpack.c.l.b16 %v1096
      %v1226 = vpack.c.b16 %v1179, %v1178
      %v1227 = vpack.c.b16 %v1181, %v1180
      %v1228 = vpack.c.b16 %v1183, %v1182
      %v1229 = vpack.c.b16 %v1185, %v1184
      %v1230 = vpack.c.b16 %v1187, %v1186
      %v1231 = vpack.c.b16 %v1189, %v1188
      %v1232 = vpack.c.b16 %v1191, %v1190
      %v1233 = vpack.c.b16 %v1193, %v1192
      %v1234 = vpack.c.b16 %v1195, %v1194
      %v1235 = vpack.c.b16 %v1197, %v1196
      %v1236 = vpack.c.b16 %v1199, %v1198
      %v1237 = vpack.c.b16 %v1201, %v1200
      %v1238 = vpack.c.b16 %v1203, %v1202
      %v1239 = vpack.c.b16 %v1205, %v1204
      %v1240 = vpack.c.b16 %v1207, %v1206
      %v1241 = vpack.c.b16 %v1209, %v1208
      %v1242 = vpack.c.b16 %v1211, %v1210
      %v1243 = vpack.c.b16 %v1213, %v1212
      %v1244 = vpack.c.b16 %v1215, %v1214
      %v1245 = vpack.c.b16 %v1217, %v1216
      %v1246 = vpack.c.b16 %v1219, %v1218
      %v1247 = vpack.c.b16 %v1221, %v1220
      %v1248 = vpack.c.b16 %v1223, %v1222
      %v1249 = vpack.c.b16 %v1225, %v1224
      %1274 = vmatpush.bf16.msra.mxu0 %v1233
      %1275 = vmatpush.bf16.msra.mxu0 %v1232
      %1276 = vmatpush.bf16.msra.mxu0 %v1231
      %1277 = vmatpush.bf16.msra.mxu0 %v1230
      %1278 = vmatpush.bf16.msra.mxu0 %v1229
      %1279 = vmatpush.bf16.msra.mxu0 %v1228
      %1280 = vmatpush.bf16.msra.mxu0 %v1227
      %1281 = vmatpush.bf16.msra.mxu0 %v1226
      %1282 = vmatmul.bf16.gmra.mxu0 %v1120
      %v1283 = vpop.f32.mrf.mxu0
      %v1284 = vadd.f32 0.0, %v1283
      %v1285 = vpop.f32.mrf.mxu0
      %v1286 = vadd.f32 0.0, %v1285
      %1287 = vdwg.mxu0
      %1288 = vmatpush.bf16.msra.mxu0 %v1241
      %1289 = vmatpush.bf16.msra.mxu0 %v1240
      %1290 = vmatpush.bf16.msra.mxu0 %v1239
      %1291 = vmatpush.bf16.msra.mxu0 %v1238
      %1292 = vmatpush.bf16.msra.mxu0 %v1237
      %1293 = vmatpush.bf16.msra.mxu0 %v1236
      %1294 = vmatpush.bf16.msra.mxu0 %v1235
      %1295 = vmatpush.bf16.msra.mxu0 %v1234
      %1296 = vmatmul.bf16.gmra.mxu0 %v1123
      %v1297 = vpop.f32.mrf.mxu0
      %v1298 = vadd.f32 %v1284, %v1297
      %v1299 = vpop.f32.mrf.mxu0
      %v1300 = vadd.f32 %v1286, %v1299
      %1301 = vdwg.mxu0
      %1302 = vmatpush.bf16.msra.mxu0 %v1249
      %1303 = vmatpush.bf16.msra.mxu0 %v1248
      %1304 = vmatpush.bf16.msra.mxu0 %v1247
      %1305 = vmatpush.bf16.msra.mxu0 %v1246
      %1306 = vmatpush.bf16.msra.mxu0 %v1245
      %1307 = vmatpush.bf16.msra.mxu0 %v1244
      %1308 = vmatpush.bf16.msra.mxu0 %v1243
      %1309 = vmatpush.bf16.msra.mxu0 %v1242
      %1310 = vmatmul.bf16.gmra.mxu0 %v1126
      %v1311 = vpop.f32.mrf.mxu0
      %v1312 = vadd.f32 %v1298, %v1311
      %v1313 = vpop.f32.mrf.mxu0
      %v1314 = vadd.f32 %v1300, %v1313
      %1315 = vdwg.mxu0
      %v1316 = vadd.f32 %v1040, %v1312
      %v1317 = vadd.f32 %v1041, %v1314
      %1318 = vst [vmem:[#allocation3] sm:$0xff] %v1316
      %1319 = vst [vmem:[#allocation3 + $0x8] sm:$0xff] %v1317
      %v1320 = vld [vmem:[#allocation3] sm:$0xff]
      %v1321 = vld [vmem:[#allocation3 + $0x8] sm:$0xff]
      %v1322 = vld [vmem:[%s3] sm:$0x1]
      %v1324 = vperm.slane %v1322, 0
      %v1326 = vadd.f32 %v1320, %v1324
      %v1327 = vadd.f32 %v1321, %v1324
      %v1328 = vmul.f32 %v1326, 0.1
      %v1329 = vmul.f32 %v1327, 0.1
      %v1330 = vmax.f32 %v1326, %v1328
      %v1331 = vmax.f32 %v1327, %v1329
      %v1332 = vpack.c.bf16 %v1330, %v1330
      %v1333 = vpack.c.bf16 %v1331, %v1331
      %1334 = vst [vmem:[%s233] sm:$0xf] %v1332
      %1335 = vst [vmem:[%s233 + $0x4] sm:$0xf] %v1333
      %s1336 = smul.u32 2, %s20
      %p1337 = scmp.lt.s32.totalorder %s19, 5
      %s1338 = scalar_select %p1337, %s19, 5
      %p1339 = scmp.lt.s32.totalorder %s1336, 1
      %s1340 = scalar_select %p1339, %s1336, 1
      %s1341 = smul.addr %s1338, 2
      %s1342 = sadd.s32 %s1340, %s1341
      %s1343 = smul.addr %s1342, 4
      %s1344 = scalar_lea.vmem %s4, %s1343
      // Predicated region
      $region37: #{rstb_input_forward.1} parent=35 // pred_check
        %p1345 = pneg %p138
      $region38: #{rstb_input_forward.1} parent=35 // pred_check_branch
        %1347 = sbr.rel (%p1345) target = $region40
      $region39: #{rstb_input_forward.1} parent=35 // pred_region
        %s1348 = smul.u32 2, %s20
      $region40: #{rstb_input_forward.1} parent=35 // pred_fallthru
        _
    $region36: #{rstb_input_forward.1} parent=5 // pred_fallthru
      _
    %p1349 = scmp.le.s32.totalorder 2, %s10
    // Predicated region
    $region41: #{rstb_input_forward.1} parent=5 // pred_check
      %p1350 = pneg %p1349
    $region42: #{rstb_input_forward.1} parent=5 // pred_check_branch
      %1352 = sbr.rel (%p1350) target = $region44
    $region43: #{rstb_input_forward.1} parent=5 // pred_region
      %s1353 = ssub.s32 %s10, 2
      // Predicated region
      $region45: #{rstb_input_forward.1} parent=43 // pred_check
        %p1354 = pneg %p144
      $region46: #{rstb_input_forward.1} parent=43 // pred_check_branch
        %1356 = sbr.rel (%p1354) target = $region48
      $region47: #{rstb_input_forward.1} parent=43 // pred_region
        %s1357 = smul.u32 2, %s22
        %p1358 = scmp.lt.s32.totalorder %s21, 5
        %s1359 = scalar_select %p1358, %s21, 5
        %p1360 = scmp.lt.s32.totalorder %s1357, 1
        %s1361 = scalar_select %p1360, %s1357, 1
        %s1362 = smul.addr %s1359, 2
        %s1363 = sadd.s32 %s1361, %s1362
        %s1364 = smul.addr %s1363, 4
        %s1365 = scalar_lea.vmem %s4, %s1364
      $region48: #{rstb_input_forward.1} parent=43 // pred_fallthru
        _
    $region44: #{rstb_input_forward.1} parent=5 // pred_fallthru
      _
  $region6: #{rstb_input_forward.1} parent=0 // loop_footer
    %s14 = sadd.s32 1, %s10
  $region7: #{rstb_input_forward.1} parent=0 // loop_footer_branch
    %9 = sbr.rel target = $region3
  $region8: #{rstb_input_forward.1} parent=0 // loop_exit
    _

</llo_original>
